<compile_context>
chip_gen: v7x
topology: tpu7x:2x2x1
jax: 0.10.0
libtpu: 0.0.40
codegen_flags: <defaults>
</compile_context>

<pallas_src>
import functools

import jax
import jax.numpy as jnp
from jax import lax
from jax.experimental import pallas as pl
from jax.experimental.pallas import tpu as pltpu


# ---------------------------------------------------------------------------
# helpers
# ---------------------------------------------------------------------------

def _sublane_pack(dtype) -> int:
    """Minimum row-tile granularity per dtype (8 for f32, 16 for bf16, 32 for int8)."""
    return 32 // jnp.dtype(dtype).itemsize


def _round_up(x: int, m: int) -> int:
    return ((x + m - 1) // m) * m


# Explicit scoped-VMEM budget: safe on v5e (16 MiB default), v6e (32 MiB default,
# 128 MiB physical) and v7x (32 MiB default, 64 MiB physical).
_VMEM_LIMIT_BYTES = 32 * 1024 * 1024
# Target for the double-buffered (in + out) pipelined footprint of one kernel.
_PIPELINE_BYTES_TARGET = 8 * 1024 * 1024


# ---------------------------------------------------------------------------
# Combiner (graph_conv=None, dropout=0.0): feature-dim concat
# ---------------------------------------------------------------------------

def _concat_kernel(static_ref, dynamic_ref, out_ref, *, static_dim):
    # dropout(p=0.0) is the identity; RGCN path is disabled (graph_conv=None).
    # TODO(synk): RGCN('bdd') graph-convolution path not implemented (graph_conv=None case).
    out_ref[:, :static_dim] = static_ref[...]
    out_ref[:, static_dim:] = dynamic_ref[...]


def combiner_concat(static_emb, dynamic_emb, mode="concat", *, tile_n=None,
                    force_pallas=False):
    """Combiner.forward with graph_conv=None, dropout=0 (== torch.cat(dim=1))."""
    if mode == "static_only":
        return static_emb
    if mode == "dynamic_only":
        return dynamic_emb
    if mode != "concat":
        raise ValueError(f"Invalid combiner mode: {mode}")

    assert static_emb.dtype == dynamic_emb.dtype, "dtypes must match for concat"
    n, ds = static_emb.shape
    n2, dd = dynamic_emb.shape
    assert n == n2, "static and dynamic embeddings must share the node axis"
    out_dim = ds + dd
    dtype = static_emb.dtype
    itemsize = jnp.dtype(dtype).itemsize
    pack = _sublane_pack(dtype)

    lane_aligned = (ds % 128 == 0) and (dd % 128 == 0)
    big_enough = n * out_dim * itemsize >= (1 << 18)  # ~256 KiB of output
    if not force_pallas and not (lane_aligned and big_enough):
        # Tiny inputs (launch overhead dominates) or a non-128-aligned lane split
        # (masked partial stores): a plain concat is already at HBM roofline.
        return jnp.concatenate([static_emb, dynamic_emb], axis=1)

    if tile_n is None:
        # Double-buffered footprint per row ~= 2 * (ds + dd + out_dim) * itemsize.
        per_row = 4 * out_dim * itemsize
        tile_n = max(pack, (_PIPELINE_BYTES_TARGET // per_row) // pack * pack)
    tile_n = max(pack, min(int(tile_n), _round_up(n, pack)))
    assert tile_n % pack == 0

    # Ragged N: cdiv grid; OOB rows of the last (padded) block are dropped on
    # writeback, and since this is a position-preserving copy that is exact.
    grid = (pl.cdiv(n, tile_n),)

    kernel = functools.partial(_concat_kernel, static_dim=ds)
    return pl.pallas_call(
        kernel,
        out_shape=jax.ShapeDtypeStruct((n, out_dim), dtype),
        grid=grid,
        in_specs=[
            pl.BlockSpec((tile_n, ds), lambda i: (i, 0)),
            pl.BlockSpec((tile_n, dd), lambda i: (i, 0)),
        ],
        out_specs=pl.BlockSpec((tile_n, out_dim), lambda i: (i, 0)),
        compiler_params=pltpu.CompilerParams(
            dimension_semantics=("parallel",),
            vmem_limit_bytes=_VMEM_LIMIT_BYTES,
        ),
    )(static_emb, dynamic_emb)


# ---------------------------------------------------------------------------
# GraphReadout: max / min / mean readout over the node axis
# ---------------------------------------------------------------------------

def _readout_kernel(x_ref, o_ref, acc_ref, *, op, n_valid, tile_n):
    i = pl.program_id(0)

    @pl.when(i == 0)
    def _init():
        init = {"max": -jnp.inf, "min": jnp.inf, "mean": 0.0}[op]
        acc_ref[...] = jnp.full(acc_ref.shape, init, dtype=acc_ref.dtype)

    x = x_ref[...].astype(jnp.float32)
    # Mask rows of the (padded) last tile that lie past the true node count.
    row = i * tile_n + lax.broadcasted_iota(jnp.int32, (tile_n, 1), 0)
    valid = row < n_valid
    if op == "max":
        x = jnp.where(valid, x, -jnp.inf)
        acc_ref[...] = jnp.maximum(acc_ref[...], jnp.max(x, axis=0, keepdims=True))
    elif op == "min":
        x = jnp.where(valid, x, jnp.inf)
        acc_ref[...] = jnp.minimum(acc_ref[...], jnp.min(x, axis=0, keepdims=True))
    else:  # mean: accumulate sum, divide at the end
        x = jnp.where(valid, x, 0.0)
        acc_ref[...] = acc_ref[...] + jnp.sum(x, axis=0, keepdims=True)

    @pl.when(i == pl.num_programs(0) - 1)
    def _finalize():
        res = acc_ref[...]
        if op == "mean":
            res = res / jnp.float32(n_valid)
        o_ref[...] = res.astype(o_ref.dtype)


def _single_graph_readout(node_emb, op, *, tile_n=None):
    n, d = node_emb.shape
    dtype = node_emb.dtype
    itemsize = jnp.dtype(dtype).itemsize
    pack = _sublane_pack(dtype)

    if tile_n is None:
        per_row = 2 * d * itemsize  # double-buffered input block
        tile_n = max(pack, (_PIPELINE_BYTES_TARGET // per_row) // pack * pack)
    tile_n = max(pack, min(int(tile_n), _round_up(n, pack)))

    kernel = functools.partial(_readout_kernel, op=op, n_valid=n, tile_n=tile_n)
    return pl.pallas_call(
        kernel,
        out_shape=jax.ShapeDtypeStruct((1, d), dtype),
        grid=(pl.cdiv(n, tile_n),),
        in_specs=[pl.BlockSpec((tile_n, d), lambda i: (i, 0))],
        out_specs=pl.BlockSpec((1, d), lambda i: (0, 0)),
        scratch_shapes=[pltpu.VMEM((1, d), jnp.float32)],
        compiler_params=pltpu.CompilerParams(
            dimension_semantics=("arbitrary",),  # reduction over the node axis
            vmem_limit_bytes=_VMEM_LIMIT_BYTES,
        ),
    )(node_emb)


def graph_readout_nodes(node_emb, num_nodes_per_graph, op="max", *, tile_n=None):
    """Mirrors dgl.readout_nodes over a DGL batched graph -> [num_graphs, D]."""
    if op not in ("max", "min", "mean"):
        raise ValueError(f"Invalid readout: {op}")
    # TODO(synk): fuse the per-graph loop into one segmented Pallas kernel
    #             (scalar-prefetched node offsets) instead of one pallas_call
    #             per graph.
    outs, start = [], 0
    for n_g in num_nodes_per_graph:
        outs.append(_single_graph_readout(node_emb[start:start + n_g], op,
                                          tile_n=tile_n))
        start += n_g
    assert start == node_emb.shape[0], "node counts must cover all nodes"
    return jnp.concatenate(outs, axis=0)


def graph_readout_weighted_sum(node_emb, gate_w, gate_b, proj_w, proj_b):
    # TODO(synk): weighted_sum readout kept in plain JAX (tiny gating MLP +
    #             linear + node-sum); fuse into a Pallas accumulation kernel if
    #             it ever becomes a hot path.
    gate = jax.nn.sigmoid(node_emb @ gate_w + gate_b)   # [N, 1]
    proj = node_emb @ proj_w + proj_b                   # [N, 2D]
    return jnp.sum(gate * proj, axis=0, keepdims=True)  # [1, 2D]


def graph_readout_forward(combined, static, dynamic, num_nodes_per_graph,
                          readout_node_type="static", readout_op="max",
                          *, tile_n=None, **weighted_sum_params):
    """GraphReadout.forward: pick the node table, reduce over nodes per graph."""
    emb_dict = {"combined": combined, "static": static, "dynamic": dynamic}
    if readout_node_type not in emb_dict:
        raise ValueError(f"Invalid type: {readout_node_type}")
    node_emb = emb_dict[readout_node_type]
    if readout_op in ("max", "min", "mean"):
        return graph_readout_nodes(node_emb, num_nodes_per_graph, readout_op,
                                   tile_n=tile_n)
    if readout_op == "weighted_sum":
        return graph_readout_weighted_sum(node_emb, **weighted_sum_params)
    raise ValueError(f"Invalid readout: {readout_op}")


# ---------------------------------------------------------------------------
# demo / self-check
# ---------------------------------------------------------------------------

if __name__ == "__main__":
    key = jax.random.PRNGKey(0)
    k_s, k_d = jax.random.split(key)

    # Small shapes: 200 nodes split across a batched graph of 2 graphs
    # (120 + 80 nodes), static dim 128, dynamic dim 256.
    N, DS, DD = 200, 128, 256
    num_nodes_per_graph = [120, 80]

    static_emb = jax.random.normal(k_s, (N, DS), dtype=jnp.float32)
    dynamic_emb = jax.random.normal(k_d, (N, DD), dtype=jnp.float32)

    # Combiner(mode='concat', graph_conv=None, dropout=0.0).
    # tile_n=64 with N=200 exercises the ragged-tail (cdiv) path; force_pallas
    # keeps the Pallas kernel on even at this small demo size.
    combined = combiner_concat(static_emb, dynamic_emb, tile_n=64,
                               force_pallas=True)
    combined = jax.block_until_ready(combined)
    ref_combined = jnp.concatenate([static_emb, dynamic_emb], axis=1)
    assert combined.shape == (N, DS + DD), combined.shape
    assert jnp.allclose(combined, ref_combined), "concat mismatch vs reference"

    # GraphReadout defaults: readout_op='max', readout_node_type='static'.
    graph_emb = graph_readout_forward(combined, static_emb, dynamic_emb,
                                      num_nodes_per_graph,
                                      readout_node_type="static",
                                      readout_op="max")
    graph_emb = jax.block_until_ready(graph_emb)
    ref_max = jnp.stack([static_emb[:120].max(axis=0),
                         static_emb[120:].max(axis=0)])
    assert graph_emb.shape == (len(num_nodes_per_graph), DS), graph_emb.shape
    assert jnp.allclose(graph_emb, ref_max), "max readout mismatch"

    # 'mean' readout over the combined table with a small tile to exercise the
    # multi-tile accumulation + masked ragged tail.
    mean_emb = graph_readout_nodes(combined, num_nodes_per_graph, op="mean",
                                   tile_n=32)
    mean_emb = jax.block_until_ready(mean_emb)
    ref_mean = jnp.stack([ref_combined[:120].mean(axis=0),
                          ref_combined[120:].mean(axis=0)])
    assert jnp.allclose(mean_emb, ref_mean, atol=1e-5, rtol=1e-5), \
        "mean readout mismatch"

    print("KERNEL_OK")
</pallas_src>

<mosaic_0001>
module attributes {stable_mosaic.version = 11 : i64} {
  func.func @_concat_kernel(%arg0: i32, %arg1: memref<64x128xf32, #tpu.memory_space<vmem>>, %arg2: memref<64x256xf32, #tpu.memory_space<vmem>>, %arg3: memref<64x384xf32, #tpu.memory_space<vmem>>) attributes {dimension_semantics = [#tpu.dimension_semantics<parallel>], iteration_bounds = array<i64: 4>, scalar_prefetch = 0 : i64, scratch_operands = 0 : i64, tpu.core_type = #tpu.core_type<tc>, window_params = [{transform_indices = @transform_0, window_bounds = array<i64: 64, 128>}, {transform_indices = @transform_1, window_bounds = array<i64: 64, 256>}, {transform_indices = @transform_2, window_bounds = array<i64: 64, 384>}]} {
    %c0 = arith.constant 0 : index
    %c0_0 = arith.constant 0 : index
    %0 = vector.load %arg1[%c0, %c0_0] : memref<64x128xf32, #tpu.memory_space<vmem>>, vector<64x128xf32>
    %c0_1 = arith.constant 0 : index
    %c0_2 = arith.constant 0 : index
    %1 = vector.load %arg3[%c0_1, %c0_2] : memref<64x384xf32, #tpu.memory_space<vmem>>, vector<64x128xf32>
    tpu.vector_store %arg3[%c0_1, %c0_2], %0 {strides = array<i32>} : memref<64x384xf32, #tpu.memory_space<vmem>>, vector<64x128xf32>,
    %c0_3 = arith.constant 0 : index
    %c0_4 = arith.constant 0 : index
    %2 = vector.load %arg2[%c0_3, %c0_4] : memref<64x256xf32, #tpu.memory_space<vmem>>, vector<64x256xf32>
    %c0_5 = arith.constant 0 : index
    %c128 = arith.constant 128 : index
    %3 = vector.load %arg3[%c0_5, %c128] : memref<64x384xf32, #tpu.memory_space<vmem>>, vector<64x256xf32>
    tpu.vector_store %arg3[%c0_5, %c128], %2 {strides = array<i32>} : memref<64x384xf32, #tpu.memory_space<vmem>>, vector<64x256xf32>,
    return
  }
  func.func @transform_0(%arg0: i32) -> (i32, i32) {
    %c0_i32 = arith.constant 0 : i32
    %c0_i32_0 = arith.constant 0 : i32
    return %arg0, %c0_i32 : i32, i32
  }
  func.func @transform_1(%arg0: i32) -> (i32, i32) {
    %c0_i32 = arith.constant 0 : i32
    %c0_i32_0 = arith.constant 0 : i32
    return %arg0, %c0_i32 : i32, i32
  }
  func.func @transform_2(%arg0: i32) -> (i32, i32) {
    %c0_i32 = arith.constant 0 : i32
    %c0_i32_0 = arith.constant 0 : i32
    return %arg0, %c0_i32 : i32, i32
  }
}

</mosaic_0001>

<llo_original>
// kernel: tpu_custom_call.1
$region0: #{tpu_custom_call.1}
  #allocation0 [shape = 'u32[]', space=smem, size = 0x4, offset = 0x4, fixed_abs, tag = 'smem constant byte address 0x4 - core index']
  #allocation1 [shape = 'u32[144,128]{1,0:T(1,128)}', space=vmem, size = 0x12000, scoped, tag = 'internal scratch']
  %s0 = inlined_call_operand.hbm [shape: f32[200,128], index: 0, kind: input, shape index: {}]
  %s1 = inlined_call_operand.hbm [shape: f32[200,256], index: 1, kind: input, shape index: {}]
  %s2 = inlined_call_operand.hbm [shape: f32[200,384], index: 2, kind: output, shape index: {}]
  %s3 = sld [smem:[#allocation0]]
  $region49: #{tpu_custom_call.1} parent=0
    _
  %s5 = ssub.s32 1, %s3
  %s6 = scalar_select 0, %s5, %s3
  $region1: #{tpu_custom_call.1} parent=0
    #allocation2 [shape = 'u8[65536]{0}', space=vmem, size = 0x10000, scoped, tag = 'input window, operand 0']
    #allocation3 [shape = 's32[2]{0}', space=sflag, size = 0x8, scoped, tag = 'scoped memory for tpu_custom_call.1']
    #allocation4 [shape = 's32[2]{0}', space=sflag, size = 0x8, scoped, tag = 'scoped memory for tpu_custom_call.1']
    #allocation5 [shape = 'u8[131072]{0}', space=vmem, size = 0x20000, scoped, tag = 'input window, operand 1']
    #allocation6 [shape = 's32[2]{0}', space=sflag, size = 0x8, scoped, tag = 'scoped memory for tpu_custom_call.1']
    #allocation7 [shape = 'u8[196608]{0}', space=vmem, size = 0x30000, scoped, tag = 'output window, operand 0']
    %7 = vsyncpa [#allocation3], 0
    %s8 = scalar_lea.sflag [#allocation3], 1
    %9 = vsyncpa %s8, 0
    %10 = vsyncpa [#allocation6], 0
    %s11 = scalar_lea.sflag [#allocation6], 1
    %12 = vsyncpa %s11, 0
    %13 = vsyncpa [#allocation4], 0
    %s14 = scalar_lea.sflag [#allocation4], 1
    %15 = vsyncpa %s14, 0
    loop: start=0, step=1, limit=6
    $region2: #{tpu_custom_call.1} parent=1 // loop_pre_header
      _
    $region3: #{tpu_custom_call.1} parent=1 // loop_header
      %s17 = sphi 0, %s21
      %p18 = scmp.ge.s32.totalorder %s17, 6
      %s27 = sphi 0, %s29
      %s30 = sphi 0, %s27
      %s31 = sphi 0, %s30
      %s47 = sphi 0, %s31
      %s53 = sphi 0, %s55
      %s56 = sphi 0, %s53
      %s57 = sphi 0, %s56
      %s73 = sphi 0, %s57
      %s79 = sphi 0, %s81
      %s82 = sphi 0, %s79
      %s83 = sphi 0, %s82
      %s99 = sphi 0, %s83
    $region4: #{tpu_custom_call.1} parent=1 // loop_header_branch
      %20 = sbr.rel (%p18) target = $region8
    $region5: #{tpu_custom_call.1} parent=1 // loop_body
      %s22 = ssub.s32 %s17, 1
      %s23 = ssub.s32 %s17, 2
      %s24 = sadd.s32 %s17, 1
      %s25 = ssub.s32 %s17, %s24
      %p26 = scmp.eq.s32.totalorder %s25, 0
      %s28 = sadd.s32 %s27, 1
      %s29 = scalar_select %p26, %s27, %s28
      %p32 = pneg %p26
      %p33 = scmp.eq.s32.totalorder %s17, 3
      %p34 = por %p32, %p33
      %p35 = scmp.ne.s32.totalorder %s27, %s30
      %p36 = scmp.eq.s32.totalorder %s17, 0
      %p37 = por %p35, %p36
      %p38 = scmp.ne.s32.totalorder %s27, %s30
      %p39 = scmp.eq.s32.totalorder %s22, 3
      %p40 = por %p38, %p39
      %p41 = scmp.ne.s32.totalorder %s30, %s31
      %p42 = scmp.eq.s32.totalorder %s22, 0
      %p43 = por %p41, %p42
      %p44 = scmp.ne.s32.totalorder %s30, %s31
      %p45 = scmp.eq.s32.totalorder %s23, 3
      %p46 = por %p44, %p45
      %p48 = scmp.ne.s32.totalorder %s31, %s47
      %p49 = scmp.eq.s32.totalorder %s23, 0
      %p50 = por %p48, %p49
      %s51 = ssub.s32 %s17, %s24
      %p52 = scmp.eq.s32.totalorder %s51, 0
      %s54 = sadd.s32 %s53, 1
      %s55 = scalar_select %p52, %s53, %s54
      %p58 = pneg %p52
      %p59 = scmp.eq.s32.totalorder %s17, 3
      %p60 = por %p58, %p59
      %p61 = scmp.ne.s32.totalorder %s53, %s56
      %p62 = scmp.eq.s32.totalorder %s17, 0
      %p63 = por %p61, %p62
      %p64 = scmp.ne.s32.totalorder %s53, %s56
      %p65 = scmp.eq.s32.totalorder %s22, 3
      %p66 = por %p64, %p65
      %p67 = scmp.ne.s32.totalorder %s56, %s57
      %p68 = scmp.eq.s32.totalorder %s22, 0
      %p69 = por %p67, %p68
      %p70 = scmp.ne.s32.totalorder %s56, %s57
      %p71 = scmp.eq.s32.totalorder %s23, 3
      %p72 = por %p70, %p71
      %p74 = scmp.ne.s32.totalorder %s57, %s73
      %p75 = scmp.eq.s32.totalorder %s23, 0
      %p76 = por %p74, %p75
      %s77 = ssub.s32 %s17, %s24
      %p78 = scmp.eq.s32.totalorder %s77, 0
      %s80 = sadd.s32 %s79, 1
      %s81 = scalar_select %p78, %s79, %s80
      %p84 = pneg %p78
      %p85 = scmp.eq.s32.totalorder %s17, 3
      %p86 = por %p84, %p85
      %p87 = scmp.ne.s32.totalorder %s79, %s82
      %p88 = scmp.eq.s32.totalorder %s17, 0
      %p89 = por %p87, %p88
      %p90 = scmp.ne.s32.totalorder %s79, %s82
      %p91 = scmp.eq.s32.totalorder %s22, 3
      %p92 = por %p90, %p91
      %p93 = scmp.ne.s32.totalorder %s82, %s83
      %p94 = scmp.eq.s32.totalorder %s22, 0
      %p95 = por %p93, %p94
      %p96 = scmp.ne.s32.totalorder %s82, %s83
      %p97 = scmp.eq.s32.totalorder %s23, 3
      %p98 = por %p96, %p97
      %p100 = scmp.ne.s32.totalorder %s83, %s99
      %p101 = scmp.eq.s32.totalorder %s23, 0
      %p102 = por %p100, %p101
      %p103 = scmp.le.s32.totalorder 1, %s17
      %p104 = scmp.lt.s32.totalorder %s17, 5
      %p105 = pnand %p103, %p104
      %p106 = pneg %p105
      // Predicated region
      $region9: #{tpu_custom_call.1} parent=5 // pred_check
        _
      $region10: #{tpu_custom_call.1} parent=5 // pred_check_branch
        %108 = sbr.rel (%p105) target = $region12
      $region11: #{tpu_custom_call.1} parent=5 // pred_region
        %s109 = ssub.s32 %s17, 1
      $region12: #{tpu_custom_call.1} parent=5 // pred_fallthru
        _
      %p110 = scmp.lt.s32.totalorder %s17, 4
      // Predicated region
      $region13: #{tpu_custom_call.1} parent=5 // pred_check
        %p111 = pneg %p110
      $region14: #{tpu_custom_call.1} parent=5 // pred_check_branch
        %113 = sbr.rel (%p111) target = $region16
      $region15: #{tpu_custom_call.1} parent=5 // pred_region
        // Predicated region
        $region17: #{tpu_custom_call.1} parent=15 // pred_check
          %p114 = pneg %p37
        $region18: #{tpu_custom_call.1} parent=15 // pred_check_branch
          %116 = sbr.rel (%p114) target = $region20
        $region19: #{tpu_custom_call.1} parent=15 // pred_region
          %s117 = sand.u32 %s27, 1
          %s118 = scalar_lea.sflag [#allocation3], %s117
          %s119 = sand.u32 %s27, 1
          %s120 = smul.addr %s119, 64
          %s121 = scalar_lea.vmem [#allocation2], %s120
          %s122 = smul.u32 8, %s17
          %s123 = ssub.s32 25, %s122
          %p124 = scmp.lt.s32.totalorder %s123, 8
          %s125 = scalar_select %p124, %s123, 8
          %s126 = smul.u32 128, %s125
          %s128 = ssub.s32 1024, %s126
          %129 = vsyncadd %s118, %s128
          %p130 = scmp.ne.s32.totalorder 0, %s126
          %s131 = smul.addr %s122, 128
          %s132 = scalar_lea.hbm %s0, %s131
          %s133 = smul.u32 8, %s125
          %s134 = sshll.u32 %s121, 4
          %s135 = int_to_ptr.vmem [resolvable:$true] %s134
          %s136 = sshll.u32 %s133, 4
          %140 = dma.hbm_to_vmem [thread:$0]  (%p130), %s132, %s136, %s135, %s118, 128, 128, 8
        $region20: #{tpu_custom_call.1} parent=15 // pred_fallthru
          _
        // Predicated region
        $region21: #{tpu_custom_call.1} parent=15 // pred_check
          %p141 = pneg %p63
        $region22: #{tpu_custom_call.1} parent=15 // pred_check_branch
          %143 = sbr.rel (%p141) target = $region24
        $region23: #{tpu_custom_call.1} parent=15 // pred_region
          %s144 = sand.u32 %s53, 1
          %s145 = scalar_lea.sflag [#allocation6], %s144
          %s146 = sand.u32 %s53, 1
          %s147 = smul.addr %s146, 128
          %s148 = scalar_lea.vmem [#allocation5], %s147
          %s149 = smul.u32 8, %s17
          %s150 = ssub.s32 25, %s149
          %p151 = scmp.lt.s32.totalorder %s150, 8
          %s152 = scalar_select %p151, %s150, 8
          %s153 = smul.u32 128, %s152
          %s154 = smul.u32 %s153, 2
          %s156 = ssub.s32 2048, %s154
          %157 = vsyncadd %s145, %s156
          %p158 = scmp.ne.s32.totalorder 0, %s154
          %s159 = smul.addr %s149, 2
          %s160 = smul.addr %s159, 128
          %s161 = scalar_lea.hbm %s1, %s160
          %s162 = smul.u32 16, %s152
          %s163 = sshll.u32 %s148, 4
          %s164 = int_to_ptr.vmem [resolvable:$true] %s163
          %s165 = sshll.u32 %s162, 4
          %169 = dma.hbm_to_vmem [thread:$0]  (%p158), %s161, %s165, %s164, %s145, 256, 256, 16
        $region24: #{tpu_custom_call.1} parent=15 // pred_fallthru
          _
      $region16: #{tpu_custom_call.1} parent=5 // pred_fallthru
        _
      %p170 = scmp.le.s32.totalorder 1, %s17
      %p171 = scmp.lt.s32.totalorder %s17, 5
      %p172 = pnand %p170, %p171
      %p173 = pneg %p172
      // Predicated region
      $region25: #{tpu_custom_call.1} parent=5 // pred_check
        _
      $region26: #{tpu_custom_call.1} parent=5 // pred_check_branch
        %175 = sbr.rel (%p172) target = $region28
      $region27: #{tpu_custom_call.1} parent=5 // pred_region
        %s176 = ssub.s32 %s17, 1
        %s177 = sand.u32 %s30, 1
        %s178 = scalar_lea.sflag [#allocation3], %s177
        %s179 = sand.u32 %s30, 1
        %s180 = smul.addr %s179, 64
        %s181 = scalar_lea.vmem [#allocation2], %s180
        // Predicated region
        $region29: #{tpu_custom_call.1} parent=27 // pred_check
          %p182 = pneg %p43
        $region30: #{tpu_custom_call.1} parent=27 // pred_check_branch
          %184 = sbr.rel (%p182) target = $region32
        $region31: #{tpu_custom_call.1} parent=27 // pred_region
          %185 = dma.done %s178, 1024
        $region32: #{tpu_custom_call.1} parent=27 // pred_fallthru
          _
        %s186 = sand.u32 %s56, 1
        %s187 = scalar_lea.sflag [#allocation6], %s186
        %s188 = sand.u32 %s56, 1
        %s189 = smul.addr %s188, 128
        %s190 = scalar_lea.vmem [#allocation5], %s189
        // Predicated region
        $region33: #{tpu_custom_call.1} parent=27 // pred_check
          %p191 = pneg %p69
        $region34: #{tpu_custom_call.1} parent=27 // pred_check_branch
          %193 = sbr.rel (%p191) target = $region36
        $region35: #{tpu_custom_call.1} parent=27 // pred_region
          %194 = dma.done %s187, 2048
        $region36: #{tpu_custom_call.1} parent=27 // pred_fallthru
          _
        %s195 = sand.u32 %s30, 1
        %s196 = scalar_lea.sflag [#allocation3], %s195
        %s197 = sand.u32 %s30, 1
        %s198 = smul.addr %s197, 64
        %s199 = scalar_lea.vmem [#allocation2], %s198
        %p200 = pneg %p43
        %p201 = pneg %p40
        %s202 = sand.u32 %s56, 1
        %s203 = scalar_lea.sflag [#allocation6], %s202
        %s204 = sand.u32 %s56, 1
        %s205 = smul.addr %s204, 128
        %s206 = scalar_lea.vmem [#allocation5], %s205
        %p207 = pneg %p69
        %p208 = pneg %p66
        %p209 = pneg %p95
        %p210 = pneg %p92
        %s211 = sand.u32 %s82, 1
        %s212 = scalar_lea.sflag [#allocation4], %s211
        %s213 = sand.u32 %s82, 1
        %s214 = smul.addr %s213, 192
        %s215 = scalar_lea.vmem [#allocation7], %s214
        %s216 = smul.u32 8, %s22
        %s217 = ssub.s32 25, %s216
        %p218 = scmp.lt.s32.totalorder %s217, 8
        %s219 = scalar_select %p218, %s217, 8
        %s220 = smul.u32 128, %s219
        %s221 = smul.u32 8, %s22
        %s222 = ssub.s32 25, %s221
        %p223 = scmp.lt.s32.totalorder %s222, 8
        %s224 = scalar_select %p223, %s222, 8
        %s225 = smul.u32 128, %s224
        %s226 = smul.u32 %s225, 2
        %s227 = smul.u32 8, %s22
        %s228 = ssub.s32 25, %s227
        %p229 = scmp.lt.s32.totalorder %s228, 8
        %s230 = scalar_select %p229, %s228, 8
        %s231 = smul.u32 128, %s230
        %s232 = smul.u32 %s231, 3
        %v233 = vld [vmem:[%s181] sm:$0xff]
        %v234 = vld [vmem:[%s181 + $0x8] sm:$0xff]
        %v235 = vld [vmem:[%s181 + $0x10] sm:$0xff]
        %v236 = vld [vmem:[%s181 + $0x18] sm:$0xff]
        %v237 = vld [vmem:[%s181 + $0x20] sm:$0xff]
        %v238 = vld [vmem:[%s181 + $0x28] sm:$0xff]
        %v239 = vld [vmem:[%s181 + $0x30] sm:$0xff]
        %v240 = vld [vmem:[%s181 + $0x38] sm:$0xff]
        %241 = vst [vmem:[%s215] sm:$0xff] %v233
        %242 = vst [vmem:[%s215 + $0x18] sm:$0xff] %v234
        %243 = vst [vmem:[%s215 + $0x30] sm:$0xff] %v235
        %244 = vst [vmem:[%s215 + $0x48] sm:$0xff] %v236
        %245 = vst [vmem:[%s215 + $0x60] sm:$0xff] %v237
        %246 = vst [vmem:[%s215 + $0x78] sm:$0xff] %v238
        %247 = vst [vmem:[%s215 + $0x90] sm:$0xff] %v239
        %248 = vst [vmem:[%s215 + $0xa8] sm:$0xff] %v240
        %v249 = vld [vmem:[%s190] sm:$0xff]
        %v250 = vld [vmem:[%s190 + $0x8] sm:$0xff]
        %v251 = vld [vmem:[%s190 + $0x10] sm:$0xff]
        %v252 = vld [vmem:[%s190 + $0x18] sm:$0xff]
        %v253 = vld [vmem:[%s190 + $0x20] sm:$0xff]
        %v254 = vld [vmem:[%s190 + $0x28] sm:$0xff]
        %v255 = vld [vmem:[%s190 + $0x30] sm:$0xff]
        %v256 = vld [vmem:[%s190 + $0x38] sm:$0xff]
        %v257 = vld [vmem:[%s190 + $0x40] sm:$0xff]
        %v258 = vld [vmem:[%s190 + $0x48] sm:$0xff]
        %v259 = vld [vmem:[%s190 + $0x50] sm:$0xff]
        %v260 = vld [vmem:[%s190 + $0x58] sm:$0xff]
        %v261 = vld [vmem:[%s190 + $0x60] sm:$0xff]
        %v262 = vld [vmem:[%s190 + $0x68] sm:$0xff]
        %v263 = vld [vmem:[%s190 + $0x70] sm:$0xff]
        %v264 = vld [vmem:[%s190 + $0x78] sm:$0xff]
        %265 = vst [vmem:[%s215 + $0x8] sm:$0xff] %v249
        %266 = vst [vmem:[%s215 + $0x10] sm:$0xff] %v250
        %267 = vst [vmem:[%s215 + $0x20] sm:$0xff] %v251
        %268 = vst [vmem:[%s215 + $0x28] sm:$0xff] %v252
        %269 = vst [vmem:[%s215 + $0x38] sm:$0xff] %v253
        %270 = vst [vmem:[%s215 + $0x40] sm:$0xff] %v254
        %271 = vst [vmem:[%s215 + $0x50] sm:$0xff] %v255
        %272 = vst [vmem:[%s215 + $0x58] sm:$0xff] %v256
        %273 = vst [vmem:[%s215 + $0x68] sm:$0xff] %v257
        %274 = vst [vmem:[%s215 + $0x70] sm:$0xff] %v258
        %275 = vst [vmem:[%s215 + $0x80] sm:$0xff] %v259
        %276 = vst [vmem:[%s215 + $0x88] sm:$0xff] %v260
        %277 = vst [vmem:[%s215 + $0x98] sm:$0xff] %v261
        %278 = vst [vmem:[%s215 + $0xa0] sm:$0xff] %v262
        %279 = vst [vmem:[%s215 + $0xb0] sm:$0xff] %v263
        %280 = vst [vmem:[%s215 + $0xb8] sm:$0xff] %v264
        %s281 = sand.u32 %s82, 1
        %s282 = scalar_lea.sflag [#allocation4], %s281
        %s283 = sand.u32 %s82, 1
        %s284 = smul.addr %s283, 192
        %s285 = scalar_lea.vmem [#allocation7], %s284
        // Predicated region
        $region37: #{tpu_custom_call.1} parent=27 // pred_check
          %p286 = pneg %p92
        $region38: #{tpu_custom_call.1} parent=27 // pred_check_branch
          %288 = sbr.rel (%p286) target = $region40
        $region39: #{tpu_custom_call.1} parent=27 // pred_region
          %s289 = smul.u32 8, %s22
          %s290 = ssub.s32 25, %s289
          %p291 = scmp.lt.s32.totalorder %s290, 8
          %s292 = scalar_select %p291, %s290, 8
          %s293 = smul.u32 128, %s292
          %s294 = smul.u32 %s293, 3
          %s296 = ssub.s32 3072, %s294
          %297 = vsyncadd %s282, %s296
          %p298 = scmp.ne.s32.totalorder 0, %s294
          %s299 = smul.addr %s289, 3
          %s300 = smul.addr %s299, 128
          %s301 = scalar_lea.hbm %s2, %s300
          %s302 = smul.u32 24, %s292
          %s303 = sshll.u32 %s285, 4
          %s304 = int_to_ptr.vmem [resolvable:$true] %s303
          %s305 = sshll.u32 %s302, 4
          %309 = dma.vmem_to_hbm [thread:$0]  (%p298), %s304, %s305, %s301, %s282, 384, 384, 24
        $region40: #{tpu_custom_call.1} parent=27 // pred_fallthru
          _
      $region28: #{tpu_custom_call.1} parent=5 // pred_fallthru
        _
      %p310 = scmp.le.s32.totalorder 2, %s17
      // Predicated region
      $region41: #{tpu_custom_call.1} parent=5 // pred_check
        %p311 = pneg %p310
      $region42: #{tpu_custom_call.1} parent=5 // pred_check_branch
        %313 = sbr.rel (%p311) target = $region44
      $region43: #{tpu_custom_call.1} parent=5 // pred_region
        %s314 = ssub.s32 %s17, 2
        // Predicated region
        $region45: #{tpu_custom_call.1} parent=43 // pred_check
          %p315 = pneg %p98
        $region46: #{tpu_custom_call.1} parent=43 // pred_check_branch
          %317 = sbr.rel (%p315) target = $region48
        $region47: #{tpu_custom_call.1} parent=43 // pred_region
          %s318 = sand.u32 %s83, 1
          %s319 = scalar_lea.sflag [#allocation4], %s318
          %s320 = sand.u32 %s83, 1
          %s321 = smul.addr %s320, 192
          %s322 = scalar_lea.vmem [#allocation7], %s321
          %323 = dma.done %s319, 3072
        $region48: #{tpu_custom_call.1} parent=43 // pred_fallthru
          _
      $region44: #{tpu_custom_call.1} parent=5 // pred_fallthru
        _
    $region6: #{tpu_custom_call.1} parent=1 // loop_footer
      %s21 = sadd.s32 1, %s17
    $region7: #{tpu_custom_call.1} parent=1 // loop_footer_branch
      %16 = sbr.rel target = $region3
    $region8: #{tpu_custom_call.1} parent=1 // loop_exit
      _
    %324 = vsyncpa [#allocation3], 1
    %s325 = scalar_lea.sflag [#allocation3], 1
    %326 = vsyncpa %s325, 1
    %327 = vsyncpa [#allocation6], 1
    %s328 = scalar_lea.sflag [#allocation6], 1
    %329 = vsyncpa %s328, 1
    %330 = vsyncpa [#allocation4], 1
    %s331 = scalar_lea.sflag [#allocation4], 1
    %332 = vsyncpa %s331, 1

</llo_original>
